<compile_context>
chip_gen: v7x
topology: tpu7x:2x2x1
jax: 0.10.0
libtpu: 0.0.40
codegen_flags: <defaults>
</compile_context>

<pallas_src>
import functools
import math

import jax
import jax.numpy as jnp
from jax import lax
from jax.experimental import pallas as pl
from jax.experimental.pallas import tpu as pltpu


# --------------------------------------------------------------------------
# Flash-attention kernel (one (batch*head, q-tile) output block; kv innermost)
# --------------------------------------------------------------------------
def _flash_kernel(q_ref, k_ref, v_ref, o_ref, m_sc, l_sc, acc_sc):
    # q_ref: (1, block_q, D)   k_ref/v_ref: (1, block_k, D)
    # o_ref: (1, block_q, D)
    # m_sc/l_sc: (block_q, 1) f32   acc_sc: (block_q, D) f32
    block_q = q_ref.shape[1]
    block_k = k_ref.shape[1]
    qi = pl.program_id(1)
    ki = pl.program_id(2)

    @pl.when(ki == 0)
    def _init():
        m_sc[...] = jnp.full_like(m_sc, -1e30)
        l_sc[...] = jnp.zeros_like(l_sc)
        acc_sc[...] = jnp.zeros_like(acc_sc)

    # Causal block skip: KV tiles strictly above the diagonal contribute
    # nothing for this q tile (requires block_q == block_k).
    @pl.when(ki <= qi)
    def _compute():
        q = q_ref[0]                                   # (block_q, D)
        k = k_ref[0]                                   # (block_k, D)
        # q @ k^T without materializing an explicit transpose.
        s = lax.dot_general(q, k, (((1,), (1,)), ((), ())),
                            preferred_element_type=jnp.float32)  # (bq, bk)

        # Intra-block causal mask.  For ki < qi this predicate is all-true
        # (cheap VPU select); it only actually masks on the diagonal tile.
        row = lax.broadcasted_iota(jnp.int32, (block_q, block_k), 0) + qi * block_q
        col = lax.broadcasted_iota(jnp.int32, (block_q, block_k), 1) + ki * block_k
        s = jnp.where(col <= row, s, jnp.float32(-1e30))

        m_prev = m_sc[...]                             # (bq, 1)
        m_new = jnp.maximum(m_prev, jnp.max(s, axis=-1, keepdims=True))
        alpha = jnp.exp(m_prev - m_new)                # rescale factor
        p = jnp.exp(s - m_new)                         # (bq, bk)

        l_sc[...] = alpha * l_sc[...] + jnp.sum(p, axis=-1, keepdims=True)
        acc_sc[...] = alpha * acc_sc[...] + jnp.dot(
            p.astype(v_ref.dtype), v_ref[0],
            preferred_element_type=jnp.float32)
        m_sc[...] = m_new

    # The diagonal block is the last KV tile with any unmasked entries for
    # this q tile; the resident output block is written back to HBM after the
    # final kv grid step (skipped steps don't touch it).
    @pl.when(ki == qi)
    def _finalize():
        inv = pl.reciprocal(l_sc[...], approx=False)   # exact; tight numerics
        o_ref[0] = (acc_sc[...] * inv).astype(o_ref.dtype)


def _flash_attention(q, k, v, *, block_q, block_k):
    """q, k, v: (B*H, T, D) contiguous per-head layout.  Returns (B*H, T, D)."""
    BH, T, D = q.shape
    assert block_q == block_k, "causal block-skip assumes square tiles"
    assert T % block_q == 0 and T % block_k == 0
    nq = T // block_q
    nk = T // block_k

    return pl.pallas_call(
        _flash_kernel,
        out_shape=jax.ShapeDtypeStruct((BH, T, D), q.dtype),
        grid_spec=pltpu.PrefetchScalarGridSpec(
            num_scalar_prefetch=0,
            grid=(BH, nq, nk),
            in_specs=[
                pl.BlockSpec((1, block_q, D), lambda bh, qi, ki: (bh, qi, 0)),
                pl.BlockSpec((1, block_k, D), lambda bh, qi, ki: (bh, ki, 0)),
                pl.BlockSpec((1, block_k, D), lambda bh, qi, ki: (bh, ki, 0)),
            ],
            out_specs=pl.BlockSpec((1, block_q, D), lambda bh, qi, ki: (bh, qi, 0)),
            scratch_shapes=[
                pltpu.VMEM((block_q, 1), jnp.float32),   # running max m
                pltpu.VMEM((block_q, 1), jnp.float32),   # running denom l
                pltpu.VMEM((block_q, D), jnp.float32),   # unnormalized acc
            ],
        ),
        compiler_params=pltpu.CompilerParams(
            dimension_semantics=("parallel", "parallel", "arbitrary")),
    )(q, k, v)


# --------------------------------------------------------------------------
# Host-side weight prep + full module forward (projections in XLA)
# --------------------------------------------------------------------------
def prepare_weights(w_qkv, w_proj, n_head):
    """One-time prep: transpose to (in, out) and fold 1/sqrt(D) into Q cols.

    w_qkv: (3C, C), w_proj: (C, C) — PyTorch nn.Linear (out, in) layout.
    """
    C = w_proj.shape[0]
    D = C // n_head
    scale = 1.0 / math.sqrt(D)
    wqkv_t = jnp.asarray(w_qkv).T                        # (C, 3C)
    wqkv_t = jnp.concatenate([wqkv_t[:, :C] * scale, wqkv_t[:, C:]], axis=1)
    wproj_t = jnp.asarray(w_proj).T                      # (C, C)
    return wqkv_t, wproj_t


@functools.partial(jax.jit, static_argnames=("n_head", "block_q", "block_k"))
def causal_self_attention(x, wqkv_t, wproj_t, *, n_head, block_q=128, block_k=128):
    """x: (B, T, C); wqkv_t: (C, 3C) scale-folded; wproj_t: (C, C)."""
    B, T, C = x.shape
    H = n_head
    D = C // H
    block_q = min(block_q, T)
    block_k = min(block_k, T)

    # --- QKV projection: plain XLA GEMM (near roofline, pipelined by XLA) ---
    x_flat = x.reshape(B * T, C)
    qkv = jnp.dot(x_flat, wqkv_t, precision=lax.Precision.HIGHEST)   # (B*T, 3C)

    def to_heads(a):  # (B*T, C) -> (B*H, T, D), contiguous per (batch, head)
        return a.reshape(B, T, H, D).transpose(0, 2, 1, 3).reshape(B * H, T, D)

    q = to_heads(qkv[:, 0 * C:1 * C])   # already scaled by 1/sqrt(D)
    k = to_heads(qkv[:, 1 * C:2 * C])
    v = to_heads(qkv[:, 2 * C:3 * C])

    # --- flash attention Pallas kernel ---
    o = _flash_attention(q, k, v, block_q=block_q, block_k=block_k)  # (B*H, T, D)

    # --- merge heads + output projection (XLA) ---
    y = o.reshape(B, H, T, D).transpose(0, 2, 1, 3).reshape(B * T, C)
    out = jnp.dot(y, wproj_t, precision=lax.Precision.HIGHEST)
    return out.reshape(B, T, C)


# --------------------------------------------------------------------------
# Pure-JAX reference (mirrors the PyTorch forward, eval mode)
# --------------------------------------------------------------------------
def _reference(x, w_qkv, w_proj, n_head):
    B, T, C = x.shape
    D = C // n_head
    qkv = jnp.einsum('btc,oc->bto', x, w_qkv, precision=lax.Precision.HIGHEST)
    q, k, v = jnp.split(qkv, 3, axis=-1)
    q = q.reshape(B, T, n_head, D).transpose(0, 2, 1, 3)
    k = k.reshape(B, T, n_head, D).transpose(0, 2, 1, 3)
    v = v.reshape(B, T, n_head, D).transpose(0, 2, 1, 3)
    att = jnp.einsum('bhtd,bhsd->bhts', q, k,
                     precision=lax.Precision.HIGHEST) / math.sqrt(D)
    mask = jnp.tril(jnp.ones((T, T), bool))
    att = jnp.where(mask[None, None], att, -jnp.inf)
    att = jax.nn.softmax(att, axis=-1)
    y = jnp.einsum('bhts,bhsd->bhtd', att, v, precision=lax.Precision.HIGHEST)
    y = y.transpose(0, 2, 1, 3).reshape(B, T, C)
    return jnp.einsum('btc,oc->bto', y, w_proj, precision=lax.Precision.HIGHEST)


if __name__ == "__main__":
    def run_case(B, T, C, H, block):
        key = jax.random.PRNGKey(0)
        kx, kq, kp = jax.random.split(key, 3)
        x = jax.random.normal(kx, (B, T, C), dtype=jnp.float32)
        # PyTorch nn.Linear weight layout: (out_features, in_features), bias=False
        w_qkv = jax.random.normal(kq, (3 * C, C), dtype=jnp.float32) * (1.0 / math.sqrt(C))
        w_proj = jax.random.normal(kp, (C, C), dtype=jnp.float32) * (1.0 / math.sqrt(C))

        wqkv_t, wproj_t = prepare_weights(w_qkv, w_proj, H)
        out = causal_self_attention(x, wqkv_t, wproj_t, n_head=H,
                                    block_q=block, block_k=block)
        out = jax.block_until_ready(out)

        ref = _reference(x, w_qkv, w_proj, H)
        assert out.shape == (B, T, C)
        err = float(jnp.max(jnp.abs(out - ref)))
        assert jnp.allclose(out, ref, atol=2e-3, rtol=2e-3), \
            f"mismatch vs reference (max abs err={err})"

    # Small shape consistent with the module (batch=2, seq=8, dim=32, heads=4).
    run_case(B=2, T=8, C=32, H=4, block=8)
    # Multi-tile case: exercises the online-softmax accumulation across KV
    # tiles, the causal block skip, and the pl.when init/finalize paths.
    run_case(B=2, T=256, C=128, H=4, block=128)

    print("KERNEL_OK")
</pallas_src>

<mosaic_0001>
module attributes {stable_mosaic.version = 11 : i64} {
  func.func @_flash_kernel(%arg0: i32, %arg1: i32, %arg2: i32, %arg3: memref<1x8x8xf32, #tpu.memory_space<vmem>>, %arg4: memref<1x8x8xf32, #tpu.memory_space<vmem>>, %arg5: memref<1x8x8xf32, #tpu.memory_space<vmem>>, %arg6: memref<1x8x8xf32, #tpu.memory_space<vmem>>, %arg7: memref<8x1xf32, #tpu.memory_space<vmem>>, %arg8: memref<8x1xf32, #tpu.memory_space<vmem>>, %arg9: memref<8x8xf32, #tpu.memory_space<vmem>>) attributes {dimension_semantics = [#tpu.dimension_semantics<parallel>, #tpu.dimension_semantics<parallel>, #tpu.dimension_semantics<arbitrary>], iteration_bounds = array<i64: 8, 1, 1>, scalar_prefetch = 0 : i64, scratch_operands = 3 : i64, tpu.core_type = #tpu.core_type<tc>, window_params = [{transform_indices = @transform_0, window_bounds = array<i64: 1, 8, 8>}, {transform_indices = @transform_1, window_bounds = array<i64: 1, 8, 8>}, {transform_indices = @transform_2, window_bounds = array<i64: 1, 8, 8>}, {transform_indices = @transform_3, window_bounds = array<i64: 1, 8, 8>}]} {
    %c0_i32 = arith.constant 0 : i32
    %0 = arith.cmpi eq, %arg2, %c0_i32 : i32
    %1 = arith.extui %0 : i1 to i32
    %c0_i32_0 = arith.constant 0 : i32
    %2 = arith.cmpi ne, %1, %c0_i32_0 : i32
    scf.if %2 {
      %cst = arith.constant -1.000000e+30 : f32
      %9 = vector.broadcast %cst : f32 to vector<8x1xf32>
      %c0 = arith.constant 0 : index
      %c0_3 = arith.constant 0 : index
      %10 = vector.load %arg7[%c0, %c0_3] : memref<8x1xf32, #tpu.memory_space<vmem>>, vector<8x1xf32>
      tpu.vector_store %arg7[%c0, %c0_3], %9 {strides = array<i32>} : memref<8x1xf32, #tpu.memory_space<vmem>>, vector<8x1xf32>,
      %cst_4 = arith.constant 0.000000e+00 : f32
      %11 = vector.broadcast %cst_4 : f32 to vector<8x1xf32>
      %c0_5 = arith.constant 0 : index
      %c0_6 = arith.constant 0 : index
      %12 = vector.load %arg8[%c0_5, %c0_6] : memref<8x1xf32, #tpu.memory_space<vmem>>, vector<8x1xf32>
      tpu.vector_store %arg8[%c0_5, %c0_6], %11 {strides = array<i32>} : memref<8x1xf32, #tpu.memory_space<vmem>>, vector<8x1xf32>,
      %cst_7 = arith.constant 0.000000e+00 : f32
      %13 = vector.broadcast %cst_7 : f32 to vector<8x8xf32>
      %c0_8 = arith.constant 0 : index
      %c0_9 = arith.constant 0 : index
      %14 = vector.load %arg9[%c0_8, %c0_9] : memref<8x8xf32, #tpu.memory_space<vmem>>, vector<8x8xf32>
      tpu.vector_store %arg9[%c0_8, %c0_9], %13 {strides = array<i32>} : memref<8x8xf32, #tpu.memory_space<vmem>>, vector<8x8xf32>,
    } else {
    }
    %3 = arith.cmpi sle, %arg2, %arg1 : i32
    %4 = arith.extui %3 : i1 to i32
    %c0_i32_1 = arith.constant 0 : i32
    %5 = arith.cmpi ne, %4, %c0_i32_1 : i32
    scf.if %5 {
      %c0 = arith.constant 0 : index
      %c0_3 = arith.constant 0 : index
      %c0_4 = arith.constant 0 : index
      %9 = vector.load %arg3[%c0, %c0_3, %c0_4] : memref<1x8x8xf32, #tpu.memory_space<vmem>>, vector<1x8x8xf32>
      %10 = vector.shape_cast %9 : vector<1x8x8xf32> to vector<8x8xf32>
      %c0_5 = arith.constant 0 : index
      %c0_6 = arith.constant 0 : index
      %c0_7 = arith.constant 0 : index
      %11 = vector.load %arg4[%c0_5, %c0_6, %c0_7] : memref<1x8x8xf32, #tpu.memory_space<vmem>>, vector<1x8x8xf32>
      %12 = vector.shape_cast %11 : vector<1x8x8xf32> to vector<8x8xf32>
      %cst = arith.constant dense<0.000000e+00> : vector<8x8xf32>
      %13 = tpu.matmul %10, %12, %cst {dimension_numbers = #tpu.dot_dimension_numbers<[1], [1], [0], [0], [0, 0, 1, 0], [], []>} : vector<8x8xf32>, vector<8x8xf32>, vector<8x8xf32> -> vector<8x8xf32>
      %14 = tpu.iota {dimensions = array<i32: 0>} : vector<8x8xi32>
      %c8_i32 = arith.constant 8 : i32
      %15 = arith.muli %arg1, %c8_i32 : i32
      %16 = vector.broadcast %15 : i32 to vector<8x8xi32>
      %17 = arith.addi %14, %16 : vector<8x8xi32>
      %18 = tpu.iota {dimensions = array<i32: 1>} : vector<8x8xi32>
      %c8_i32_8 = arith.constant 8 : i32
      %19 = arith.muli %arg2, %c8_i32_8 : i32
      %20 = vector.broadcast %19 : i32 to vector<8x8xi32>
      %21 = arith.addi %18, %20 : vector<8x8xi32>
      %22 = arith.cmpi sle, %21, %17 : vector<8x8xi32>
      %cst_9 = arith.constant -1.000000e+30 : f32
      %23 = vector.broadcast %cst_9 : f32 to vector<8x8xf32>
      %24 = arith.select %22, %13, %23 : vector<8x8xi1>, vector<8x8xf32>
      %c0_10 = arith.constant 0 : index
      %c0_11 = arith.constant 0 : index
      %25 = vector.load %arg7[%c0_10, %c0_11] : memref<8x1xf32, #tpu.memory_space<vmem>>, vector<8x1xf32>
      %cst_12 = arith.constant dense<0xFF800000> : vector<8xf32>
      %26 = vector.multi_reduction <maximumf>, %24, %cst_12 [1] : vector<8x8xf32> to vector<8xf32>
      %27 = vector.shape_cast %26 : vector<8xf32> to vector<8x1xf32>
      %28 = arith.maximumf %25, %27 : vector<8x1xf32>
      %29 = arith.subf %25, %28 : vector<8x1xf32>
      %30 = math.exp %29 : vector<8x1xf32>
      %31 = vector.broadcast %28 : vector<8x1xf32> to vector<8x8xf32>
      %32 = arith.subf %24, %31 : vector<8x8xf32>
      %33 = math.exp %32 : vector<8x8xf32>
      %c0_13 = arith.constant 0 : index
      %c0_14 = arith.constant 0 : index
      %34 = vector.load %arg8[%c0_13, %c0_14] : memref<8x1xf32, #tpu.memory_space<vmem>>, vector<8x1xf32>
      %35 = arith.mulf %30, %34 : vector<8x1xf32>
      %cst_15 = arith.constant dense<0.000000e+00> : vector<8xf32>
      %36 = vector.multi_reduction <add>, %33, %cst_15 [1] : vector<8x8xf32> to vector<8xf32>
      %37 = vector.shape_cast %36 : vector<8xf32> to vector<8x1xf32>
      %38 = arith.addf %35, %37 : vector<8x1xf32>
      %c0_16 = arith.constant 0 : index
      %c0_17 = arith.constant 0 : index
      %39 = vector.load %arg8[%c0_16, %c0_17] : memref<8x1xf32, #tpu.memory_space<vmem>>, vector<8x1xf32>
      tpu.vector_store %arg8[%c0_16, %c0_17], %38 {strides = array<i32>} : memref<8x1xf32, #tpu.memory_space<vmem>>, vector<8x1xf32>,
      %c0_18 = arith.constant 0 : index
      %c0_19 = arith.constant 0 : index
      %40 = vector.load %arg9[%c0_18, %c0_19] : memref<8x8xf32, #tpu.memory_space<vmem>>, vector<8x8xf32>
      %41 = vector.broadcast %30 : vector<8x1xf32> to vector<8x8xf32>
      %42 = arith.mulf %41, %40 : vector<8x8xf32>
      %c0_20 = arith.constant 0 : index
      %c0_21 = arith.constant 0 : index
      %c0_22 = arith.constant 0 : index
      %43 = vector.load %arg5[%c0_20, %c0_21, %c0_22] : memref<1x8x8xf32, #tpu.memory_space<vmem>>, vector<1x8x8xf32>
      %44 = vector.shape_cast %43 : vector<1x8x8xf32> to vector<8x8xf32>
      %cst_23 = arith.constant dense<0.000000e+00> : vector<8x8xf32>
      %45 = tpu.matmul %33, %44, %cst_23 {dimension_numbers = #tpu.dot_dimension_numbers<[1], [0], [0], [1], [0, 0, 1, 1], [], []>} : vector<8x8xf32>, vector<8x8xf32>, vector<8x8xf32> -> vector<8x8xf32>
      %46 = arith.addf %42, %45 : vector<8x8xf32>
      %c0_24 = arith.constant 0 : index
      %c0_25 = arith.constant 0 : index
      %47 = vector.load %arg9[%c0_24, %c0_25] : memref<8x8xf32, #tpu.memory_space<vmem>>, vector<8x8xf32>
      tpu.vector_store %arg9[%c0_24, %c0_25], %46 {strides = array<i32>} : memref<8x8xf32, #tpu.memory_space<vmem>>, vector<8x8xf32>,
      %c0_26 = arith.constant 0 : index
      %c0_27 = arith.constant 0 : index
      %48 = vector.load %arg7[%c0_26, %c0_27] : memref<8x1xf32, #tpu.memory_space<vmem>>, vector<8x1xf32>
      tpu.vector_store %arg7[%c0_26, %c0_27], %28 {strides = array<i32>} : memref<8x1xf32, #tpu.memory_space<vmem>>, vector<8x1xf32>,
    } else {
    }
    %6 = arith.cmpi eq, %arg2, %arg1 : i32
    %7 = arith.extui %6 : i1 to i32
    %c0_i32_2 = arith.constant 0 : i32
    %8 = arith.cmpi ne, %7, %c0_i32_2 : i32
    scf.if %8 {
      %c0 = arith.constant 0 : index
      %c0_3 = arith.constant 0 : index
      %9 = vector.load %arg8[%c0, %c0_3] : memref<8x1xf32, #tpu.memory_space<vmem>>, vector<8x1xf32>
      %10 = tpu.reciprocal %9 : vector<8x1xf32> -> vector<8x1xf32>
      %c0_4 = arith.constant 0 : index
      %c0_5 = arith.constant 0 : index
      %11 = vector.load %arg9[%c0_4, %c0_5] : memref<8x8xf32, #tpu.memory_space<vmem>>, vector<8x8xf32>
      %12 = vector.broadcast %10 : vector<8x1xf32> to vector<8x8xf32>
      %13 = arith.mulf %11, %12 : vector<8x8xf32>
      %c0_6 = arith.constant 0 : index
      %c0_7 = arith.constant 0 : index
      %c0_8 = arith.constant 0 : index
      %14 = vector.load %arg6[%c0_6, %c0_7, %c0_8] : memref<1x8x8xf32, #tpu.memory_space<vmem>>, vector<1x8x8xf32>
      %15 = vector.shape_cast %14 : vector<1x8x8xf32> to vector<8x8xf32>
      %16 = vector.shape_cast %13 : vector<8x8xf32> to vector<1x8x8xf32>
      tpu.vector_store %arg6[%c0_6, %c0_7, %c0_8], %16 {strides = array<i32>} : memref<1x8x8xf32, #tpu.memory_space<vmem>>, vector<1x8x8xf32>,
    } else {
    }
    return
  }
  func.func @transform_0(%arg0: i32, %arg1: i32, %arg2: i32) -> (i32, i32, i32) {
    %c0_i32 = arith.constant 0 : i32
    %c0_i32_0 = arith.constant 0 : i32
    return %arg0, %arg1, %c0_i32 : i32, i32, i32
  }
  func.func @transform_1(%arg0: i32, %arg1: i32, %arg2: i32) -> (i32, i32, i32) {
    %c0_i32 = arith.constant 0 : i32
    %c0_i32_0 = arith.constant 0 : i32
    return %arg0, %arg2, %c0_i32 : i32, i32, i32
  }
  func.func @transform_2(%arg0: i32, %arg1: i32, %arg2: i32) -> (i32, i32, i32) {
    %c0_i32 = arith.constant 0 : i32
    %c0_i32_0 = arith.constant 0 : i32
    return %arg0, %arg2, %c0_i32 : i32, i32, i32
  }
  func.func @transform_3(%arg0: i32, %arg1: i32, %arg2: i32) -> (i32, i32, i32) {
    %c0_i32 = arith.constant 0 : i32
    %c0_i32_0 = arith.constant 0 : i32
    return %arg0, %arg1, %c0_i32 : i32, i32, i32
  }
}

</mosaic_0001>

<llo_original>
// kernel: causal_self_attention.1
$region0: #{causal_self_attention.1}
  #allocation0 [shape = 'u32[]', space=smem, size = 0x4, offset = 0x4, fixed_abs, tag = 'smem constant byte address 0x4 - core index']
  #allocation1 [shape = 'u32[144,128]{1,0:T(1,128)}', space=vmem, size = 0x12000, scoped, tag = 'internal scratch']
  #allocation2 [shape = 'f32[8,1]{1,0:T(8,128)}', space=vmem, size = 0x1000, scoped, tag = 'scratch operand']
  #allocation3 [shape = 'f32[8,1]{1,0:T(8,128)}', space=vmem, size = 0x1000, scoped, tag = 'scratch operand']
  #allocation4 [shape = 'f32[8,8]{1,0:T(8,128)}', space=vmem, size = 0x1000, scoped, tag = 'scratch operand']
  %s0 = inlined_call_operand.vmem [shape: f32[8,8,8], index: 0, kind: input, shape index: {}]
  %s1 = inlined_call_operand.vmem [shape: f32[8,8,8], index: 1, kind: input, shape index: {}]
  %s2 = inlined_call_operand.vmem [shape: f32[8,8,8], index: 2, kind: input, shape index: {}]
  %s3 = inlined_call_operand.vmem [shape: f32[8,8,8], index: 3, kind: output, shape index: {}]
  %s4 = sld [smem:[#allocation0]]
  $region57: #{causal_self_attention.1} parent=0
    _
  %s6 = ssub.s32 1, %s4
  %s7 = scalar_select 0, %s6, %s4
  loop: start=0, step=1, limit=10
  $region2: #{causal_self_attention.1} parent=0 // loop_pre_header
    _
  $region3: #{causal_self_attention.1} parent=0 // loop_header
    %s9 = sphi 0, %s13
    %p10 = scmp.ge.s32.totalorder %s9, 10
    %s16 = sphi 0, %s35
    %s17 = sphi 0, %s31
    %s18 = sphi 0, %s27
    %s19 = sphi 0, %s16
    %s20 = sphi 0, %s17
    %s21 = sphi 0, %s18
    %s22 = sphi 0, %s19
    %s23 = sphi 0, %s20
    %s24 = sphi 0, %s21
    %s40 = sphi 0, %s42
    %s43 = sphi 0, %s40
    %s44 = sphi 0, %s43
    %s60 = sphi 0, %s44
    %s68 = sphi 0, %s70
    %s71 = sphi 0, %s68
    %s72 = sphi 0, %s71
    %s88 = sphi 0, %s72
    %s96 = sphi 0, %s98
    %s99 = sphi 0, %s96
    %s100 = sphi 0, %s99
    %s116 = sphi 0, %s100
    %s124 = sphi 0, %s126
    %s127 = sphi 0, %s124
    %s128 = sphi 0, %s127
    %s144 = sphi 0, %s128
  $region4: #{causal_self_attention.1} parent=0 // loop_header_branch
    %12 = sbr.rel (%p10) target = $region8
  $region5: #{causal_self_attention.1} parent=0 // loop_body
    %s14 = ssub.s32 %s9, 1
    %s15 = ssub.s32 %s9, 2
    %s25 = sadd.s32 1, %s18
    %p26 = scmp.ge.s32.totalorder %s25, 1
    %s27 = scalar_select %p26, 0, %s25
    %s28 = sadd.s32 1, %s17
    %s29 = scalar_select %p26, %s28, %s17
    %p30 = scmp.ge.s32.totalorder %s29, 1
    %s31 = scalar_select %p30, 0, %s29
    %s32 = sadd.s32 1, %s16
    %s33 = scalar_select %p30, %s32, %s16
    %p34 = scmp.ge.s32.totalorder %s33, 8
    %s35 = scalar_select %p34, 0, %s33
    %s36 = ssub.s32 %s16, %s35
    %s37 = ssub.s32 %s17, %s31
    %s38 = sor.u32 %s36, %s37
    %p39 = scmp.eq.s32.totalorder %s38, 0
    %s41 = sadd.s32 %s40, 1
    %s42 = scalar_select %p39, %s40, %s41
    %p45 = pneg %p39
    %p46 = scmp.eq.s32.totalorder %s9, 7
    %p47 = por %p45, %p46
    %p48 = scmp.ne.s32.totalorder %s40, %s43
    %p49 = scmp.eq.s32.totalorder %s9, 0
    %p50 = por %p48, %p49
    %p51 = scmp.ne.s32.totalorder %s40, %s43
    %p52 = scmp.eq.s32.totalorder %s14, 7
    %p53 = por %p51, %p52
    %p54 = scmp.ne.s32.totalorder %s43, %s44
    %p55 = scmp.eq.s32.totalorder %s14, 0
    %p56 = por %p54, %p55
    %p57 = scmp.ne.s32.totalorder %s43, %s44
    %p58 = scmp.eq.s32.totalorder %s15, 7
    %p59 = por %p57, %p58
    %p61 = scmp.ne.s32.totalorder %s44, %s60
    %p62 = scmp.eq.s32.totalorder %s15, 0
    %p63 = por %p61, %p62
    %s64 = ssub.s32 %s16, %s35
    %s65 = ssub.s32 %s18, %s27
    %s66 = sor.u32 %s64, %s65
    %p67 = scmp.eq.s32.totalorder %s66, 0
    %s69 = sadd.s32 %s68, 1
    %s70 = scalar_select %p67, %s68, %s69
    %p73 = pneg %p67
    %p74 = scmp.eq.s32.totalorder %s9, 7
    %p75 = por %p73, %p74
    %p76 = scmp.ne.s32.totalorder %s68, %s71
    %p77 = scmp.eq.s32.totalorder %s9, 0
    %p78 = por %p76, %p77
    %p79 = scmp.ne.s32.totalorder %s68, %s71
    %p80 = scmp.eq.s32.totalorder %s14, 7
    %p81 = por %p79, %p80
    %p82 = scmp.ne.s32.totalorder %s71, %s72
    %p83 = scmp.eq.s32.totalorder %s14, 0
    %p84 = por %p82, %p83
    %p85 = scmp.ne.s32.totalorder %s71, %s72
    %p86 = scmp.eq.s32.totalorder %s15, 7
    %p87 = por %p85, %p86
    %p89 = scmp.ne.s32.totalorder %s72, %s88
    %p90 = scmp.eq.s32.totalorder %s15, 0
    %p91 = por %p89, %p90
    %s92 = ssub.s32 %s16, %s35
    %s93 = ssub.s32 %s18, %s27
    %s94 = sor.u32 %s92, %s93
    %p95 = scmp.eq.s32.totalorder %s94, 0
    %s97 = sadd.s32 %s96, 1
    %s98 = scalar_select %p95, %s96, %s97
    %p101 = pneg %p95
    %p102 = scmp.eq.s32.totalorder %s9, 7
    %p103 = por %p101, %p102
    %p104 = scmp.ne.s32.totalorder %s96, %s99
    %p105 = scmp.eq.s32.totalorder %s9, 0
    %p106 = por %p104, %p105
    %p107 = scmp.ne.s32.totalorder %s96, %s99
    %p108 = scmp.eq.s32.totalorder %s14, 7
    %p109 = por %p107, %p108
    %p110 = scmp.ne.s32.totalorder %s99, %s100
    %p111 = scmp.eq.s32.totalorder %s14, 0
    %p112 = por %p110, %p111
    %p113 = scmp.ne.s32.totalorder %s99, %s100
    %p114 = scmp.eq.s32.totalorder %s15, 7
    %p115 = por %p113, %p114
    %p117 = scmp.ne.s32.totalorder %s100, %s116
    %p118 = scmp.eq.s32.totalorder %s15, 0
    %p119 = por %p117, %p118
    %s120 = ssub.s32 %s16, %s35
    %s121 = ssub.s32 %s17, %s31
    %s122 = sor.u32 %s120, %s121
    %p123 = scmp.eq.s32.totalorder %s122, 0
    %s125 = sadd.s32 %s124, 1
    %s126 = scalar_select %p123, %s124, %s125
    %p129 = pneg %p123
    %p130 = scmp.eq.s32.totalorder %s9, 7
    %p131 = por %p129, %p130
    %p132 = scmp.ne.s32.totalorder %s124, %s127
    %p133 = scmp.eq.s32.totalorder %s9, 0
    %p134 = por %p132, %p133
    %p135 = scmp.ne.s32.totalorder %s124, %s127
    %p136 = scmp.eq.s32.totalorder %s14, 7
    %p137 = por %p135, %p136
    %p138 = scmp.ne.s32.totalorder %s127, %s128
    %p139 = scmp.eq.s32.totalorder %s14, 0
    %p140 = por %p138, %p139
    %p141 = scmp.ne.s32.totalorder %s127, %s128
    %p142 = scmp.eq.s32.totalorder %s15, 7
    %p143 = por %p141, %p142
    %p145 = scmp.ne.s32.totalorder %s128, %s144
    %p146 = scmp.eq.s32.totalorder %s15, 0
    %p147 = por %p145, %p146
    %p148 = scmp.le.s32.totalorder 1, %s9
    %p149 = scmp.lt.s32.totalorder %s9, 9
    %p150 = pnand %p148, %p149
    %p151 = pneg %p150
    // Predicated region
    $region9: #{causal_self_attention.1} parent=5 // pred_check
      _
    $region10: #{causal_self_attention.1} parent=5 // pred_check_branch
      %153 = sbr.rel (%p150) target = $region12
    $region11: #{causal_self_attention.1} parent=5 // pred_region
      %s154 = ssub.s32 %s9, 1
    $region12: #{causal_self_attention.1} parent=5 // pred_fallthru
      _
    %p155 = scmp.lt.s32.totalorder %s9, 8
    // Predicated region
    $region13: #{causal_self_attention.1} parent=5 // pred_check
      %p156 = pneg %p155
    $region14: #{causal_self_attention.1} parent=5 // pred_check_branch
      %158 = sbr.rel (%p156) target = $region16
    $region15: #{causal_self_attention.1} parent=5 // pred_region
      // Predicated region
      $region17: #{causal_self_attention.1} parent=15 // pred_check
        %p159 = pneg %p50
      $region18: #{causal_self_attention.1} parent=15 // pred_check_branch
        %161 = sbr.rel (%p159) target = $region20
      $region19: #{causal_self_attention.1} parent=15 // pred_region
        %p162 = scmp.lt.s32.totalorder %s16, 7
        %s163 = scalar_select %p162, %s16, 7
        %p164 = scmp.lt.s32.totalorder %s17, 0
        %s165 = scalar_select %p164, %s17, 0
        %s166 = sadd.s32 %s165, %s163
        %s167 = smul.addr %s166, 8
        %s168 = scalar_lea.vmem %s0, %s167
      $region20: #{causal_self_attention.1} parent=15 // pred_fallthru
        _
      // Predicated region
      $region21: #{causal_self_attention.1} parent=15 // pred_check
        %p169 = pneg %p78
      $region22: #{causal_self_attention.1} parent=15 // pred_check_branch
        %171 = sbr.rel (%p169) target = $region24
      $region23: #{causal_self_attention.1} parent=15 // pred_region
        %p172 = scmp.lt.s32.totalorder %s16, 7
        %s173 = scalar_select %p172, %s16, 7
        %p174 = scmp.lt.s32.totalorder %s18, 0
        %s175 = scalar_select %p174, %s18, 0
        %s176 = sadd.s32 %s175, %s173
        %s177 = smul.addr %s176, 8
        %s178 = scalar_lea.vmem %s1, %s177
      $region24: #{causal_self_attention.1} parent=15 // pred_fallthru
        _
      // Predicated region
      $region25: #{causal_self_attention.1} parent=15 // pred_check
        %p179 = pneg %p106
      $region26: #{causal_self_attention.1} parent=15 // pred_check_branch
        %181 = sbr.rel (%p179) target = $region28
      $region27: #{causal_self_attention.1} parent=15 // pred_region
        %p182 = scmp.lt.s32.totalorder %s16, 7
        %s183 = scalar_select %p182, %s16, 7
        %p184 = scmp.lt.s32.totalorder %s18, 0
        %s185 = scalar_select %p184, %s18, 0
        %s186 = sadd.s32 %s185, %s183
        %s187 = smul.addr %s186, 8
        %s188 = scalar_lea.vmem %s2, %s187
      $region28: #{causal_self_attention.1} parent=15 // pred_fallthru
        _
    $region16: #{causal_self_attention.1} parent=5 // pred_fallthru
      _
    %p189 = scmp.le.s32.totalorder 1, %s9
    %p190 = scmp.lt.s32.totalorder %s9, 9
    %p191 = pnand %p189, %p190
    %p192 = pneg %p191
    // Predicated region
    $region29: #{causal_self_attention.1} parent=5 // pred_check
      _
    $region30: #{causal_self_attention.1} parent=5 // pred_check_branch
      %194 = sbr.rel (%p191) target = $region32
    $region31: #{causal_self_attention.1} parent=5 // pred_region
      %s195 = ssub.s32 %s9, 1
      %p196 = scmp.lt.s32.totalorder %s19, 7
      %s197 = scalar_select %p196, %s19, 7
      %p198 = scmp.lt.s32.totalorder %s20, 0
      %s199 = scalar_select %p198, %s20, 0
      %s200 = sadd.s32 %s199, %s197
      %s201 = smul.addr %s200, 8
      %s202 = scalar_lea.vmem %s0, %s201
      %p203 = pneg %p56
      %p204 = pneg %p53
      %p205 = scmp.lt.s32.totalorder %s19, 7
      %s206 = scalar_select %p205, %s19, 7
      %p207 = scmp.lt.s32.totalorder %s21, 0
      %s208 = scalar_select %p207, %s21, 0
      %s209 = sadd.s32 %s208, %s206
      %s210 = smul.addr %s209, 8
      %s211 = scalar_lea.vmem %s1, %s210
      %p212 = pneg %p84
      %p213 = pneg %p81
      %p214 = scmp.lt.s32.totalorder %s19, 7
      %s215 = scalar_select %p214, %s19, 7
      %p216 = scmp.lt.s32.totalorder %s21, 0
      %s217 = scalar_select %p216, %s21, 0
      %s218 = sadd.s32 %s217, %s215
      %s219 = smul.addr %s218, 8
      %s220 = scalar_lea.vmem %s2, %s219
      %p221 = pneg %p112
      %p222 = pneg %p109
      %p223 = pneg %p140
      %p224 = pneg %p137
      %p225 = scmp.lt.s32.totalorder %s19, 7
      %s226 = scalar_select %p225, %s19, 7
      %p227 = scmp.lt.s32.totalorder %s20, 0
      %s228 = scalar_select %p227, %s20, 0
      %s229 = sadd.s32 %s228, %s226
      %s230 = smul.addr %s229, 8
      %s231 = scalar_lea.vmem %s3, %s230
      %p232 = scmp.lt.s32.totalorder %s19, 7
      %s233 = scalar_select %p232, %s19, 7
      %p234 = scmp.lt.s32.totalorder %s20, 0
      %s235 = scalar_select %p234, %s20, 0
      %s236 = sadd.s32 %s235, %s233
      %s237 = smul.addr %s236, 8
      %s238 = scalar_lea.vmem %s0, %s237
      %p239 = scmp.lt.s32.totalorder %s19, 7
      %s240 = scalar_select %p239, %s19, 7
      %p241 = scmp.lt.s32.totalorder %s21, 0
      %s242 = scalar_select %p241, %s21, 0
      %s243 = sadd.s32 %s242, %s240
      %s244 = smul.addr %s243, 8
      %s245 = scalar_lea.vmem %s1, %s244
      %p246 = scmp.lt.s32.totalorder %s19, 7
      %s247 = scalar_select %p246, %s19, 7
      %p248 = scmp.lt.s32.totalorder %s21, 0
      %s249 = scalar_select %p248, %s21, 0
      %s250 = sadd.s32 %s249, %s247
      %s251 = smul.addr %s250, 8
      %s252 = scalar_lea.vmem %s2, %s251
      %p253 = scmp.lt.s32.totalorder %s19, 7
      %s254 = scalar_select %p253, %s19, 7
      %p255 = scmp.lt.s32.totalorder %s20, 0
      %s256 = scalar_select %p255, %s20, 0
      %s257 = sadd.s32 %s256, %s254
      %s258 = smul.addr %s257, 8
      %s259 = scalar_lea.vmem %s3, %s258
      %p260 = scmp.eq.s32.totalorder %s21, 0
      // Predicated region
      $region33: #{causal_self_attention.1} parent=31 // pred_check
        %p261 = pneg %p260
      $region34: #{causal_self_attention.1} parent=31 // pred_check_branch
        %263 = sbr.rel (%p261) target = $region36
      $region35: #{causal_self_attention.1} parent=31 // pred_region
        %vm264 = vcmask 7168
        %265 = vst.msk [vmem:[#allocation2] sm:$0xff] %vm264, -1e+30
        %266 = vst.msk [vmem:[#allocation3] sm:$0xff] %vm264, 0.0
        %vm267 = vcmask 64512
        %268 = vst.msk [vmem:[#allocation4] sm:$0xff] %vm267, 0.0
      $region36: #{causal_self_attention.1} parent=31 // pred_fallthru
        _
      %p269 = scmp.le.s32.totalorder %s21, %s20
      // Predicated region
      $region37: #{causal_self_attention.1} parent=31 // pred_check
        %p270 = pneg %p269
      $region38: #{causal_self_attention.1} parent=31 // pred_check_branch
        %272 = sbr.rel (%p270) target = $region40
      $region39: #{causal_self_attention.1} parent=31 // pred_region
        %v273 = vld [vmem:[%s238] sm:$0xff]
        %v274 = vld [vmem:[%s245] sm:$0xff]
        %vm275 = vcmask 64512
        %v277 = vsel %vm275, %v273, 0
        %v280 = vsel %vm275, %v274, 0
        %282 = vmatprep.subr.mxu0 0.0
        %283 = vmatpush1.xpose.msra.mxu0 %v280
        %284 = vmatprep.subr.mxu0 0.0
        %285 = vmatpush1.xpose.msra.mxu0 0.0
        %286 = vmatprep.subr.mxu0 0.0
        %287 = vmatpush1.xpose.msra.mxu0 0.0
        %288 = vmatprep.subr.mxu0 0.0
        %289 = vmatpush1.xpose.msra.mxu0 0.0
        %290 = vmatprep.subr.mxu0 0.0
        %291 = vmatpush1.xpose.msra.mxu0 0.0
        %292 = vmatprep.subr.mxu0 0.0
        %293 = vmatpush1.xpose.msra.mxu0 0.0
        %294 = vmatprep.subr.mxu0 0.0
        %295 = vmatpush1.xpose.msra.mxu0 0.0
        %296 = vmatprep.subr.mxu0 0.0
        %297 = vmatpush1.xpose.msra.mxu0 0.0
        %298 = vmatprep.subr.mxu0 0.0
        %299 = vmatpush1.xpose.msra.mxu0 0.0
        %300 = vmatprep.subr.mxu0 0.0
        %301 = vmatpush1.xpose.msra.mxu0 0.0
        %302 = vmatprep.subr.mxu0 0.0
        %303 = vmatpush1.xpose.msra.mxu0 0.0
        %304 = vmatprep.subr.mxu0 0.0
        %305 = vmatpush1.xpose.msra.mxu0 0.0
        %306 = vmatprep.subr.mxu0 0.0
        %307 = vmatpush1.xpose.msra.mxu0 0.0
        %308 = vmatprep.subr.mxu0 0.0
        %309 = vmatpush1.xpose.msra.mxu0 0.0
        %310 = vmatprep.subr.mxu0 0.0
        %311 = vmatpush1.xpose.msra.mxu0 0.0
        %312 = vmatprep.subr.mxu0 0.0
        %313 = vmatpush1.xpose.msra.mxu0 0.0
        %314 = vmatprep.subr.mxu0 0.0
        %315 = vmatpush1.xpose.msra.mxu0 0.0
        %316 = vmatprep.subr.mxu0 0.0
        %317 = vmatpush1.xpose.msra.mxu0 0.0
        %318 = vmatprep.subr.mxu0 0.0
        %319 = vmatpush1.xpose.msra.mxu0 0.0
        %320 = vmatprep.subr.mxu0 0.0
        %321 = vmatpush1.xpose.msra.mxu0 0.0
        %322 = vmatprep.subr.mxu0 0.0
        %323 = vmatpush1.xpose.msra.mxu0 0.0
        %324 = vmatprep.subr.mxu0 0.0
        %325 = vmatpush1.xpose.msra.mxu0 0.0
        %326 = vmatprep.subr.mxu0 0.0
        %327 = vmatpush1.xpose.msra.mxu0 0.0
        %328 = vmatprep.subr.mxu0 0.0
        %329 = vmatpush1.xpose.msra.mxu0 0.0
        %330 = vmatprep.subr.mxu0 0.0
        %331 = vmatpush1.xpose.msra.mxu0 0.0
        %332 = vmatprep.subr.mxu0 0.0
        %333 = vmatpush1.xpose.msra.mxu0 0.0
        %334 = vmatprep.subr.mxu0 0.0
        %335 = vmatpush1.xpose.msra.mxu0 0.0
        %336 = vmatprep.subr.mxu0 0.0
        %337 = vmatpush1.xpose.msra.mxu0 0.0
        %338 = vmatprep.subr.mxu0 0.0
        %339 = vmatpush1.xpose.msra.mxu0 0.0
        %340 = vmatprep.subr.mxu0 0.0
        %341 = vmatpush1.xpose.msra.mxu0 0.0
        %342 = vmatprep.subr.mxu0 0.0
        %343 = vmatpush1.xpose.msra.mxu0 0.0
        %344 = vmatprep.subr.mxu0 0.0
        %345 = vmatpush1.xpose.msra.mxu0 0.0
        %346 = vmatprep.mubr.f32.mxu0 0.0
        %347 = vmatmul.mubr.f32.gmra.mrb[0].mxu0 %v277
        %v348 = vpop.f32.mrb[0].mxu0
        %v349 = vadd.f32 0.0, %v348
        %v350 = vpop.f32.mrb[0].mxu0
        %351 = vdwg.mxu0
        %v352 = vlaneseq
        %v353 = vshrl.u32 %v352, 7
        %s354 = smul.u32 %s20, 8
        %v355 = vstv %s354
        %v356 = vadd.s32 %v353, %v355
        %v357 = vlaneseq
        %v358 = vand.u32 %v357, 127
        %s359 = smul.u32 %s21, 8
        %v360 = vstv %s359
        %v361 = vadd.s32 %v358, %v360
        %vm362 = vcmp.le.s32.totalorder %v361, %v356
        %v363 = vsel %vm362, %v349, -1e+30
        %v364 = vld [vmem:[#allocation2] sm:$0xff]
        %v365 = vsel %vm275, %v363, -inf
        %366 = vmax.xlane.f32.xlu0 %v365
        %v367 = vpop.xlane.xlu0 %366
        %v368 = vmax.f32 %v364, %v367
        %v369 = vsub.f32 %v364, %v368
        %v370 = vmul.f32 %v369, 1.442695
        %v371 = vpow.pop %v370
        %373 = vset.pattern.permute.xlu0 0
        %374 = vperm.xlu0 %373, %v368
        %v375 = vpop.permute.xlu0 %374
        %v377 = vsub.f32 %v363, %v375
        %v378 = vmul.f32 %v377, 1.442695
        %v379 = vpow.pop %v378
        %v380 = vld [vmem:[#allocation3] sm:$0xff]
        %v381 = vmul.f32 %v371, %v380
        %v382 = vsel %vm275, %v379, 0.0
        %383 = vadd.xlane.f32.xlu0 %v382
        %v384 = vpop.xlane.xlu0 %383
        %v385 = vadd.f32 %v381, %v384
        %vm386 = vcmask 7168
        %387 = vst.msk [vmem:[#allocation3] sm:$0xff] %vm386, %v385
        %v388 = vld [vmem:[#allocation4] sm:$0xff]
        %390 = vset.pattern.permute.xlu0 0
        %391 = vperm.xlu0 %390, %v371
        %v392 = vpop.permute.xlu0 %391
        %v394 = vmul.f32 %v392, %v388
        %v395 = vld [vmem:[%s252] sm:$0xff]
        %v397 = vsel %vm275, %v379, 0
        %399 = vmatprep.subr.mxu0 0.0
        %400 = vmatpush1.msra.mxu0 %v395
        %401 = vmatprep.subr.mxu0 0.0
        %402 = vmatpush1.msra.mxu0 0.0
        %403 = vmatprep.subr.mxu0 0.0
        %404 = vmatpush1.msra.mxu0 0.0
        %405 = vmatprep.subr.mxu0 0.0
        %406 = vmatpush1.msra.mxu0 0.0
        %407 = vmatprep.subr.mxu0 0.0
        %408 = vmatpush1.msra.mxu0 0.0
        %409 = vmatprep.subr.mxu0 0.0
        %410 = vmatpush1.msra.mxu0 0.0
        %411 = vmatprep.subr.mxu0 0.0
        %412 = vmatpush1.msra.mxu0 0.0
        %413 = vmatprep.subr.mxu0 0.0
        %414 = vmatpush1.msra.mxu0 0.0
        %415 = vmatprep.subr.mxu0 0.0
        %416 = vmatpush1.msra.mxu0 0.0
        %417 = vmatprep.subr.mxu0 0.0
        %418 = vmatpush1.msra.mxu0 0.0
        %419 = vmatprep.subr.mxu0 0.0
        %420 = vmatpush1.msra.mxu0 0.0
        %421 = vmatprep.subr.mxu0 0.0
        %422 = vmatpush1.msra.mxu0 0.0
        %423 = vmatprep.subr.mxu0 0.0
        %424 = vmatpush1.msra.mxu0 0.0
        %425 = vmatprep.subr.mxu0 0.0
        %426 = vmatpush1.msra.mxu0 0.0
        %427 = vmatprep.subr.mxu0 0.0
        %428 = vmatpush1.msra.mxu0 0.0
        %429 = vmatprep.subr.mxu0 0.0
        %430 = vmatpush1.msra.mxu0 0.0
        %431 = vmatprep.subr.mxu0 0.0
        %432 = vmatpush1.msra.mxu0 0.0
        %433 = vmatprep.subr.mxu0 0.0
        %434 = vmatpush1.msra.mxu0 0.0
        %435 = vmatprep.subr.mxu0 0.0
        %436 = vmatpush1.msra.mxu0 0.0
        %437 = vmatprep.subr.mxu0 0.0
        %438 = vmatpush1.msra.mxu0 0.0
        %439 = vmatprep.subr.mxu0 0.0
        %440 = vmatpush1.msra.mxu0 0.0
        %441 = vmatprep.subr.mxu0 0.0
        %442 = vmatpush1.msra.mxu0 0.0
        %443 = vmatprep.subr.mxu0 0.0
        %444 = vmatpush1.msra.mxu0 0.0
        %445 = vmatprep.subr.mxu0 0.0
        %446 = vmatpush1.msra.mxu0 0.0
        %447 = vmatprep.subr.mxu0 0.0
        %448 = vmatpush1.msra.mxu0 0.0
        %449 = vmatprep.subr.mxu0 0.0
        %450 = vmatpush1.msra.mxu0 0.0
        %451 = vmatprep.subr.mxu0 0.0
        %452 = vmatpush1.msra.mxu0 0.0
        %453 = vmatprep.subr.mxu0 0.0
        %454 = vmatpush1.msra.mxu0 0.0
        %455 = vmatprep.subr.mxu0 0.0
        %456 = vmatpush1.msra.mxu0 0.0
        %457 = vmatprep.subr.mxu0 0.0
        %458 = vmatpush1.msra.mxu0 0.0
        %459 = vmatprep.subr.mxu0 0.0
        %460 = vmatpush1.msra.mxu0 0.0
        %461 = vmatprep.subr.mxu0 0.0
        %462 = vmatpush1.msra.mxu0 0.0
        %463 = vmatprep.mubr.f32.mxu0 0.0
        %464 = vmatmul.mubr.f32.gmra.mrb[0].mxu0 %v397
        %v465 = vpop.f32.mrb[0].mxu0
        %v466 = vadd.f32 0.0, %v465
        %v467 = vpop.f32.mrb[0].mxu0
        %468 = vdwg.mxu0
        %v469 = vadd.f32 %v394, %v466
        %470 = vst.msk [vmem:[#allocation4] sm:$0xff] %vm275, %v469
        %471 = vst.msk [vmem:[#allocation2] sm:$0xff] %vm386, %v368
      $region40: #{causal_self_attention.1} parent=31 // pred_fallthru
        _
      %p472 = scmp.eq.s32.totalorder %s21, %s20
      // Predicated region
      $region41: #{causal_self_attention.1} parent=31 // pred_check
        %p473 = pneg %p472
      $region42: #{causal_self_attention.1} parent=31 // pred_check_branch
        %475 = sbr.rel (%p473) target = $region44
      $region43: #{causal_self_attention.1} parent=31 // pred_region
        %v476 = vld [vmem:[#allocation3] sm:$0xff]
        %v477 = vrcp.pop %v476
        %v478 = vld [vmem:[#allocation4] sm:$0xff]
        %480 = vset.pattern.permute.xlu0 0
        %481 = vperm.xlu0 %480, %v477
        %v482 = vpop.permute.xlu0 %481
        %v484 = vmul.f32 %v478, %v482
        %vm485 = vcmask 64512
        %486 = vst.msk [vmem:[%s259] sm:$0xff] %vm485, %v484
      $region44: #{causal_self_attention.1} parent=31 // pred_fallthru
        _
      %p487 = scmp.lt.s32.totalorder %s19, 7
      %s488 = scalar_select %p487, %s19, 7
      %p489 = scmp.lt.s32.totalorder %s20, 0
      %s490 = scalar_select %p489, %s20, 0
      %s491 = sadd.s32 %s490, %s488
      %s492 = smul.addr %s491, 8
      %s493 = scalar_lea.vmem %s3, %s492
      // Predicated region
      $region45: #{causal_self_attention.1} parent=31 // pred_check
        %p494 = pneg %p137
      $region46: #{causal_self_attention.1} parent=31 // pred_check_branch
        %496 = sbr.rel (%p494) target = $region48
      $region47: #{causal_self_attention.1} parent=31 // pred_region
        _
      $region48: #{causal_self_attention.1} parent=31 // pred_fallthru
        _
    $region32: #{causal_self_attention.1} parent=5 // pred_fallthru
      _
    %p497 = scmp.le.s32.totalorder 2, %s9
    // Predicated region
    $region49: #{causal_self_attention.1} parent=5 // pred_check
      %p498 = pneg %p497
    $region50: #{causal_self_attention.1} parent=5 // pred_check_branch
      %500 = sbr.rel (%p498) target = $region52
    $region51: #{causal_self_attention.1} parent=5 // pred_region
      %s501 = ssub.s32 %s9, 2
      // Predicated region
      $region53: #{causal_self_attention.1} parent=51 // pred_check
        %p502 = pneg %p143
      $region54: #{causal_self_attention.1} parent=51 // pred_check_branch
        %504 = sbr.rel (%p502) target = $region56
      $region55: #{causal_self_attention.1} parent=51 // pred_region
        %p505 = scmp.lt.s32.totalorder %s22, 7
        %s506 = scalar_select %p505, %s22, 7
        %p507 = scmp.lt.s32.totalorder %s23, 0
        %s508 = scalar_select %p507, %s23, 0
        %s509 = sadd.s32 %s508, %s506
        %s510 = smul.addr %s509, 8
        %s511 = scalar_lea.vmem %s3, %s510
      $region56: #{causal_self_attention.1} parent=51 // pred_fallthru
        _
    $region52: #{causal_self_attention.1} parent=5 // pred_fallthru
      _
  $region6: #{causal_self_attention.1} parent=0 // loop_footer
    %s13 = sadd.s32 1, %s9
  $region7: #{causal_self_attention.1} parent=0 // loop_footer_branch
    %8 = sbr.rel target = $region3
  $region8: #{causal_self_attention.1} parent=0 // loop_exit
    _

</llo_original>
